<compile_context>
chip_gen: v6e
topology: v6e:2x2x1
jax: 0.10.0
libtpu: 0.0.40
codegen_flags: <defaults>
</compile_context>

<pallas_src>
import functools

import jax
import jax.numpy as jnp
from jax import lax
from jax.experimental import pallas as pl
from jax.experimental.pallas import tpu as pltpu


def _to_f32(x):
    # Only insert a cast when actually needed (free on the f32 path).
    return x if x.dtype == jnp.float32 else x.astype(jnp.float32)


def _round_up(x, m):
    return (x + m - 1) // m * m


# ---------------------------------------------------------------------------
# Fast path: resident z / weight tables, in-kernel one-hot (MXU) gather.
# ---------------------------------------------------------------------------
def _mip_gather_kernel(src_ref, dst_ref, et_ref, zT_ref, wT_ref, o_ref, *, sigmoid):
    # src/dst/et: (1, TE) int32   zT: (D, N)   wT: (D, num_et)   o: (1, TE)
    te = src_ref.shape[-1]
    n_nodes = zT_ref.shape[-1]
    n_et = wT_ref.shape[-1]

    src = src_ref[0, :]                      # (TE,) int32, lane-major
    dst = dst_ref[0, :]
    et = et_ref[0, :]

    node_iota = lax.broadcasted_iota(jnp.int32, (n_nodes, te), 0)
    oh_src = (node_iota == src[None, :]).astype(jnp.float32)      # (N, TE)
    oh_dst = (node_iota == dst[None, :]).astype(jnp.float32)      # (N, TE)
    et_iota = lax.broadcasted_iota(jnp.int32, (n_et, te), 0)
    oh_et = (et_iota == et[None, :]).astype(jnp.float32)          # (num_et, TE)

    zT = _to_f32(zT_ref[...])                                     # (D, N)
    wT = _to_f32(wT_ref[...])                                     # (D, num_et)

    # Exact row gathers via one-hot matmuls (single nonzero per column -> exact).
    zi = jnp.dot(zT, oh_src, preferred_element_type=jnp.float32)  # (D, TE)
    zj = jnp.dot(zT, oh_dst, preferred_element_type=jnp.float32)  # (D, TE)
    we = jnp.dot(wT, oh_et, preferred_element_type=jnp.float32)   # (D, TE)

    val = jnp.sum(zi * zj * we, axis=0, keepdims=True)            # (1, TE), lane-dense
    if sigmoid:
        val = jax.nn.sigmoid(val)
    o_ref[...] = val.astype(o_ref.dtype)


# ---------------------------------------------------------------------------
# Fallback path: wrapper-side gathers, streamed (edge_tile, D) blocks.
# ---------------------------------------------------------------------------
def _mip_streaming_kernel(zi_ref, zj_ref, we_ref, o_ref, *, sigmoid):
    prod = _to_f32(zi_ref[...]) * _to_f32(zj_ref[...]) * _to_f32(we_ref[...])
    val = jnp.sum(prod, axis=-1)                                  # (TE,)
    if sigmoid:
        val = jax.nn.sigmoid(val)
    o_ref[...] = val[None, :].astype(o_ref.dtype)                 # lane-dense (1, TE)


def multi_inner_product_decoder(z, weight, edge_index, edge_type,
                                sigmoid=True, edge_tile=1024):
    """z: (N, D), weight: (num_et, D), edge_index: (2, E) int, edge_type: (E,) int
    -> (E,) float32."""
    z = jnp.asarray(z)
    weight = jnp.asarray(weight)
    N, D = z.shape
    num_et = weight.shape[0]
    E = edge_index.shape[1]

    # Edge tile: multiple of 128 (lane-dense output / index blocks), clamped so
    # tiny problems are not over-padded.
    edge_tile = max(128, min(_round_up(int(edge_tile), 128), _round_up(E, 128)))
    E_pad = _round_up(E, edge_tile)
    n_tiles = E_pad // edge_tile

    src = edge_index[0].astype(jnp.int32)
    dst = edge_index[1].astype(jnp.int32)
    et = edge_type.astype(jnp.int32)
    if E_pad != E:
        pad = E_pad - E
        src = jnp.pad(src, (0, pad))   # index 0 is valid; padded rows sliced off
        dst = jnp.pad(dst, (0, pad))
        et = jnp.pad(et, (0, pad))

    # VMEM budget (v5e/v6e: 128 MiB, v7x: 64 MiB physical).
    try:
        vmem_cap = int(pltpu.get_tpu_info().vmem_capacity_bytes)
    except Exception:
        vmem_cap = 64 * 1024 * 1024
    itemsize = jnp.dtype(z.dtype).itemsize

    table_bytes = (N * D + num_et * D) * itemsize          # resident tables
    onehot_bytes = (2 * N + num_et + 3 * D + 8) * edge_tile * 4   # live temporaries
    stream_idx_bytes = 2 * (3 + 1) * edge_tile * 4         # idx blocks + out, 2x buffered
    resident_est = 2 * table_bytes + onehot_bytes + stream_idx_bytes
    budget = min(vmem_cap // 2, 48 * 1024 * 1024)
    use_resident = (resident_est <= budget) and (N <= 4096)

    if use_resident:
        zT = z.T                         # (D, N)  -- tiny, keeps edge axis lane-major
        wT = weight.T                    # (D, num_et)
        src2 = src.reshape(1, E_pad)
        dst2 = dst.reshape(1, E_pad)
        et2 = et.reshape(1, E_pad)

        vmem_limit = int(max(32 * 1024 * 1024,
                             min(2 * resident_est, int(0.75 * vmem_cap))))

        out = pl.pallas_call(
            functools.partial(_mip_gather_kernel, sigmoid=sigmoid),
            out_shape=jax.ShapeDtypeStruct((1, E_pad), jnp.float32),
            grid=(n_tiles,),
            in_specs=[
                pl.BlockSpec((1, edge_tile), lambda i: (0, i)),
                pl.BlockSpec((1, edge_tile), lambda i: (0, i)),
                pl.BlockSpec((1, edge_tile), lambda i: (0, i)),
                pl.BlockSpec((D, N), lambda i: (0, 0)),        # resident in VMEM
                pl.BlockSpec((D, num_et), lambda i: (0, 0)),   # resident in VMEM
            ],
            out_specs=pl.BlockSpec((1, edge_tile), lambda i: (0, i)),
            compiler_params=pltpu.CompilerParams(
                dimension_semantics=("parallel",),
                vmem_limit_bytes=vmem_limit),
        )(src2, dst2, et2, zT, wT)
        return out[0, :E]

    # TODO(synk): for node tables too large for VMEM, the row gathers stay in XLA
    # (HBM-materialized); a fully fused variant would DMA rows per tile via
    # scalar-prefetched indices.
    zi = jnp.take(z, src, axis=0)        # (E_pad, D)
    zj = jnp.take(z, dst, axis=0)
    we = jnp.take(weight, et, axis=0)

    stream_est = 3 * 2 * edge_tile * D * itemsize + 2 * edge_tile * 4
    vmem_limit = int(max(32 * 1024 * 1024,
                         min(2 * stream_est, int(0.75 * vmem_cap))))

    out = pl.pallas_call(
        functools.partial(_mip_streaming_kernel, sigmoid=sigmoid),
        out_shape=jax.ShapeDtypeStruct((1, E_pad), jnp.float32),
        grid=(n_tiles,),
        in_specs=[pl.BlockSpec((edge_tile, D), lambda i: (i, 0))] * 3,
        out_specs=pl.BlockSpec((1, edge_tile), lambda i: (0, i)),
        compiler_params=pltpu.CompilerParams(
            dimension_semantics=("parallel",),
            vmem_limit_bytes=vmem_limit),
    )(zi, zj, we)
    return out[0, :E]


def reference(z, weight, edge_index, edge_type, sigmoid=True):
    val = jnp.sum(z[edge_index[0]] * z[edge_index[1]] * weight[edge_type], axis=1)
    return jax.nn.sigmoid(val) if sigmoid else val


if __name__ == "__main__":
    key = jax.random.PRNGKey(0)
    k_z, k_w, k_src, k_dst, k_et = jax.random.split(key, 5)

    num_nodes = 32
    in_dim = 32
    num_et = 4
    num_edges = 16

    z = jax.random.normal(k_z, (num_nodes, in_dim), dtype=jnp.float32)
    # reset_parameters(): normal with std = 1/sqrt(in_dim)
    weight = (jax.random.normal(k_w, (num_et, in_dim), dtype=jnp.float32)
              / jnp.sqrt(jnp.float32(in_dim)))

    edge_index = jnp.stack([
        jax.random.randint(k_src, (num_edges,), 0, num_nodes, dtype=jnp.int32),
        jax.random.randint(k_dst, (num_edges,), 0, num_nodes, dtype=jnp.int32),
    ], axis=0)
    edge_type = jax.random.randint(k_et, (num_edges,), 0, num_et, dtype=jnp.int32)

    # Test 1: sigmoid=True, single tile.
    out = multi_inner_product_decoder(z, weight, edge_index, edge_type, sigmoid=True)
    out = jax.block_until_ready(out)
    ref = reference(z, weight, edge_index, edge_type, sigmoid=True)
    assert out.shape == (num_edges,)
    assert jnp.allclose(out, ref, atol=1e-5, rtol=1e-5), (out, ref)

    # Test 2: sigmoid=False, multi-tile grid (E=300, edge_tile=128 -> 3 grid steps).
    num_edges2 = 300
    k2a, k2b, k2c = jax.random.split(jax.random.PRNGKey(1), 3)
    edge_index2 = jnp.stack([
        jax.random.randint(k2a, (num_edges2,), 0, num_nodes, dtype=jnp.int32),
        jax.random.randint(k2b, (num_edges2,), 0, num_nodes, dtype=jnp.int32),
    ], axis=0)
    edge_type2 = jax.random.randint(k2c, (num_edges2,), 0, num_et, dtype=jnp.int32)
    out2 = multi_inner_product_decoder(z, weight, edge_index2, edge_type2,
                                       sigmoid=False, edge_tile=128)
    out2 = jax.block_until_ready(out2)
    ref2 = reference(z, weight, edge_index2, edge_type2, sigmoid=False)
    assert out2.shape == (num_edges2,)
    assert jnp.allclose(out2, ref2, atol=1e-5, rtol=1e-5), (out2, ref2)

    print("KERNEL_OK")
</pallas_src>

<mosaic_0001>
module attributes {stable_mosaic.version = 11 : i64} {
  func.func @_mip_gather_kernel(%arg0: i32, %arg1: memref<1x128xi32, #tpu.memory_space<vmem>>, %arg2: memref<1x128xi32, #tpu.memory_space<vmem>>, %arg3: memref<1x128xi32, #tpu.memory_space<vmem>>, %arg4: memref<32x32xf32, #tpu.memory_space<vmem>>, %arg5: memref<32x4xf32, #tpu.memory_space<vmem>>, %arg6: memref<1x128xf32, #tpu.memory_space<vmem>>) attributes {dimension_semantics = [#tpu.dimension_semantics<parallel>], iteration_bounds = array<i64: 1>, scalar_prefetch = 0 : i64, scratch_operands = 0 : i64, tpu.core_type = #tpu.core_type<tc>, window_params = [{transform_indices = @transform_0, window_bounds = array<i64: 1, 128>}, {transform_indices = @transform_1, window_bounds = array<i64: 1, 128>}, {transform_indices = @transform_2, window_bounds = array<i64: 1, 128>}, {pipeline_mode = #tpu.pipeline_mode<synchronous>, transform_indices = @transform_3, window_bounds = array<i64: 32, 32>}, {pipeline_mode = #tpu.pipeline_mode<synchronous>, transform_indices = @transform_4, window_bounds = array<i64: 32, 4>}, {transform_indices = @transform_5, window_bounds = array<i64: 1, 128>}]} {
    %c0 = arith.constant 0 : index
    %c0_0 = arith.constant 0 : index
    %0 = vector.load %arg1[%c0, %c0_0] : memref<1x128xi32, #tpu.memory_space<vmem>>, vector<1x128xi32>
    %1 = vector.shape_cast %0 : vector<1x128xi32> to vector<128xi32>
    %c0_1 = arith.constant 0 : index
    %c0_2 = arith.constant 0 : index
    %2 = vector.load %arg2[%c0_1, %c0_2] : memref<1x128xi32, #tpu.memory_space<vmem>>, vector<1x128xi32>
    %3 = vector.shape_cast %2 : vector<1x128xi32> to vector<128xi32>
    %c0_3 = arith.constant 0 : index
    %c0_4 = arith.constant 0 : index
    %4 = vector.load %arg3[%c0_3, %c0_4] : memref<1x128xi32, #tpu.memory_space<vmem>>, vector<1x128xi32>
    %5 = vector.shape_cast %4 : vector<1x128xi32> to vector<128xi32>
    %6 = tpu.iota {dimensions = array<i32: 0>} : vector<32x128xi32>
    %7 = vector.shape_cast %1 : vector<128xi32> to vector<1x128xi32>
    %8 = vector.broadcast %7 : vector<1x128xi32> to vector<32x128xi32>
    %9 = arith.cmpi eq, %6, %8 : vector<32x128xi32>
    %10 = arith.extui %9 : vector<32x128xi1> to vector<32x128xi32>
    %11 = arith.sitofp %10 : vector<32x128xi32> to vector<32x128xf32>
    %12 = vector.shape_cast %3 : vector<128xi32> to vector<1x128xi32>
    %13 = vector.broadcast %12 : vector<1x128xi32> to vector<32x128xi32>
    %14 = arith.cmpi eq, %6, %13 : vector<32x128xi32>
    %15 = arith.extui %14 : vector<32x128xi1> to vector<32x128xi32>
    %16 = arith.sitofp %15 : vector<32x128xi32> to vector<32x128xf32>
    %17 = tpu.iota {dimensions = array<i32: 0>} : vector<4x128xi32>
    %18 = vector.shape_cast %5 : vector<128xi32> to vector<1x128xi32>
    %19 = vector.broadcast %18 : vector<1x128xi32> to vector<4x128xi32>
    %20 = arith.cmpi eq, %17, %19 : vector<4x128xi32>
    %21 = arith.extui %20 : vector<4x128xi1> to vector<4x128xi32>
    %22 = arith.sitofp %21 : vector<4x128xi32> to vector<4x128xf32>
    %c0_5 = arith.constant 0 : index
    %c0_6 = arith.constant 0 : index
    %23 = vector.load %arg4[%c0_5, %c0_6] : memref<32x32xf32, #tpu.memory_space<vmem>>, vector<32x32xf32>
    %c0_7 = arith.constant 0 : index
    %c0_8 = arith.constant 0 : index
    %24 = vector.load %arg5[%c0_7, %c0_8] : memref<32x4xf32, #tpu.memory_space<vmem>>, vector<32x4xf32>
    %cst = arith.constant dense<0.000000e+00> : vector<32x128xf32>
    %25 = tpu.matmul %23, %11, %cst {dimension_numbers = #tpu.dot_dimension_numbers<[1], [0], [0], [1], [0, 0, 1, 1], [], []>} : vector<32x32xf32>, vector<32x128xf32>, vector<32x128xf32> -> vector<32x128xf32>
    %cst_9 = arith.constant dense<0.000000e+00> : vector<32x128xf32>
    %26 = tpu.matmul %23, %16, %cst_9 {dimension_numbers = #tpu.dot_dimension_numbers<[1], [0], [0], [1], [0, 0, 1, 1], [], []>} : vector<32x32xf32>, vector<32x128xf32>, vector<32x128xf32> -> vector<32x128xf32>
    %cst_10 = arith.constant dense<0.000000e+00> : vector<32x128xf32>
    %27 = tpu.matmul %24, %22, %cst_10 {dimension_numbers = #tpu.dot_dimension_numbers<[1], [0], [0], [1], [0, 0, 1, 1], [], []>} : vector<32x4xf32>, vector<4x128xf32>, vector<32x128xf32> -> vector<32x128xf32>
    %28 = arith.mulf %25, %26 : vector<32x128xf32>
    %29 = arith.mulf %28, %27 : vector<32x128xf32>
    %cst_11 = arith.constant dense<0.000000e+00> : vector<128xf32>
    %30 = vector.multi_reduction <add>, %29, %cst_11 [0] : vector<32x128xf32> to vector<128xf32>
    %31 = vector.shape_cast %30 : vector<128xf32> to vector<1x128xf32>
    %32 = arith.negf %31 : vector<1x128xf32>
    %33 = math.exp %32 : vector<1x128xf32>
    %cst_12 = arith.constant 1.000000e+00 : f32
    %34 = vector.broadcast %cst_12 : f32 to vector<1x128xf32>
    %35 = arith.addf %34, %33 : vector<1x128xf32>
    %36 = arith.divf %34, %35 : vector<1x128xf32>
    %c0_13 = arith.constant 0 : index
    %c0_14 = arith.constant 0 : index
    %37 = vector.load %arg6[%c0_13, %c0_14] : memref<1x128xf32, #tpu.memory_space<vmem>>, vector<1x128xf32>
    tpu.vector_store %arg6[%c0_13, %c0_14], %36 {strides = array<i32>} : memref<1x128xf32, #tpu.memory_space<vmem>>, vector<1x128xf32>,
    return
  }
  func.func @transform_0(%arg0: i32) -> (i32, i32) {
    %c0_i32 = arith.constant 0 : i32
    %c0_i32_0 = arith.constant 0 : i32
    return %c0_i32, %arg0 : i32, i32
  }
  func.func @transform_1(%arg0: i32) -> (i32, i32) {
    %c0_i32 = arith.constant 0 : i32
    %c0_i32_0 = arith.constant 0 : i32
    return %c0_i32, %arg0 : i32, i32
  }
  func.func @transform_2(%arg0: i32) -> (i32, i32) {
    %c0_i32 = arith.constant 0 : i32
    %c0_i32_0 = arith.constant 0 : i32
    return %c0_i32, %arg0 : i32, i32
  }
  func.func @transform_3(%arg0: i32) -> (i32, i32) {
    %c0_i32 = arith.constant 0 : i32
    %c0_i32_0 = arith.constant 0 : i32
    %c0_i32_1 = arith.constant 0 : i32
    return %c0_i32, %c0_i32_0 : i32, i32
  }
  func.func @transform_4(%arg0: i32) -> (i32, i32) {
    %c0_i32 = arith.constant 0 : i32
    %c0_i32_0 = arith.constant 0 : i32
    %c0_i32_1 = arith.constant 0 : i32
    return %c0_i32, %c0_i32_0 : i32, i32
  }
  func.func @transform_5(%arg0: i32) -> (i32, i32) {
    %c0_i32 = arith.constant 0 : i32
    %c0_i32_0 = arith.constant 0 : i32
    return %c0_i32, %arg0 : i32, i32
  }
}

</mosaic_0001>

<llo_original>
// kernel: tpu_custom_call.1
$region0: #{tpu_custom_call.1}
  #allocation0 [shape = 'u32[]', space=smem, size = 0x4, offset = 0x4, fixed_abs, tag = 'smem constant byte address 0x4 - core index']
  #allocation1 [shape = 'u32[144,128]{1,0:T(1,128)}', space=vmem, size = 0x12000, scoped, tag = 'internal scratch']
  %s0 = inlined_call_operand.vmem [shape: s32[1,128], index: 0, kind: input, shape index: {}]
  %s1 = inlined_call_operand.vmem [shape: s32[1,128], index: 1, kind: input, shape index: {}]
  %s2 = inlined_call_operand.vmem [shape: s32[1,128], index: 2, kind: input, shape index: {}]
  %s3 = inlined_call_operand.vmem [shape: f32[32,32], index: 3, kind: input, shape index: {}]
  %s4 = inlined_call_operand.vmem [shape: f32[32,4], index: 4, kind: input, shape index: {}]
  %s5 = inlined_call_operand.hbm [shape: f32[1,128], index: 5, kind: output, shape index: {}]
  %s6 = sld [smem:[#allocation0]]
  $region30: #{tpu_custom_call.1} parent=0
    _
  %s8 = ssub.s32 1, %s6
  %s9 = scalar_select 0, %s8, %s6
  $region1: #{tpu_custom_call.1} parent=0
    #allocation2 [shape = 'u8[512]{0}', space=vmem, size = 0x400, scoped, tag = 'output window, operand 0, single buffered']
    #allocation3 [shape = 's32[1]{0}', space=sflag, size = 0x4, scoped, tag = 'scoped memory for tpu_custom_call.1']
    %10 = vsyncpa [#allocation3], 0
    // Predicated region
    $region2: #{tpu_custom_call.1} parent=1 // pred_check
      _
    $region3: #{tpu_custom_call.1} parent=1 // pred_check_branch
      %12 = sbr.rel (0) target = $region5
    $region4: #{tpu_custom_call.1} parent=1 // pred_region
      _
    $region5: #{tpu_custom_call.1} parent=1 // pred_fallthru
      _
    // Predicated region
    $region6: #{tpu_custom_call.1} parent=1 // pred_check
      _
    $region7: #{tpu_custom_call.1} parent=1 // pred_check_branch
      %14 = sbr.rel (0) target = $region9
    $region8: #{tpu_custom_call.1} parent=1 // pred_region
      _
    $region9: #{tpu_custom_call.1} parent=1 // pred_fallthru
      _
    // Predicated region
    $region10: #{tpu_custom_call.1} parent=1 // pred_check
      _
    $region11: #{tpu_custom_call.1} parent=1 // pred_check_branch
      %16 = sbr.rel (0) target = $region13
    $region12: #{tpu_custom_call.1} parent=1 // pred_region
      _
    $region13: #{tpu_custom_call.1} parent=1 // pred_fallthru
      _
    // Predicated region
    $region14: #{tpu_custom_call.1} parent=1 // pred_check
      _
    $region15: #{tpu_custom_call.1} parent=1 // pred_check_branch
      %18 = sbr.rel (0) target = $region17
    $region16: #{tpu_custom_call.1} parent=1 // pred_region
      _
    $region17: #{tpu_custom_call.1} parent=1 // pred_fallthru
      _
    // Predicated region
    $region18: #{tpu_custom_call.1} parent=1 // pred_check
      _
    $region19: #{tpu_custom_call.1} parent=1 // pred_check_branch
      %20 = sbr.rel (0) target = $region21
    $region20: #{tpu_custom_call.1} parent=1 // pred_region
      _
    $region21: #{tpu_custom_call.1} parent=1 // pred_fallthru
      _
    %v21 = vld [vmem:[%s0] sm:$0x1]
    %v22 = vld [vmem:[%s1] sm:$0x1]
    %v23 = vld [vmem:[%s2] sm:$0x1]
    %v24 = vlaneseq
    %v25 = vshrl.u32 %v24, 7
    %v26 = vadd.s32 %v25, 8
    %v27 = vadd.s32 %v25, 16
    %v28 = vadd.s32 %v25, 24
    %v29 = vlaneseq
    %v30 = vshrl.u32 %v29, 7
    %v31 = vsub.s32 0, %v30
    %v32 = vrot.slane %v21, %v31
    %vm33 = vcmp.eq.s32.totalorder %v25, %v32
    %vm34 = vcmp.eq.s32.totalorder %v26, %v32
    %vm35 = vcmp.eq.s32.totalorder %v27, %v32
    %vm36 = vcmp.eq.s32.totalorder %v28, %v32
    %v37 = vsel %vm33, 1, 0
    %v38 = vsel %vm34, 1, 0
    %v39 = vsel %vm35, 1, 0
    %v40 = vsel %vm36, 1, 0
    %v41 = vcvt.s32.f32 %v37
    %v42 = vcvt.s32.f32 %v38
    %v43 = vcvt.s32.f32 %v39
    %v44 = vcvt.s32.f32 %v40
    %v45 = vlaneseq
    %v46 = vshrl.u32 %v45, 7
    %v47 = vsub.s32 0, %v46
    %v48 = vrot.slane %v22, %v47
    %vm49 = vcmp.eq.s32.totalorder %v25, %v48
    %vm50 = vcmp.eq.s32.totalorder %v26, %v48
    %vm51 = vcmp.eq.s32.totalorder %v27, %v48
    %vm52 = vcmp.eq.s32.totalorder %v28, %v48
    %v53 = vsel %vm49, 1, 0
    %v54 = vsel %vm50, 1, 0
    %v55 = vsel %vm51, 1, 0
    %v56 = vsel %vm52, 1, 0
    %v57 = vcvt.s32.f32 %v53
    %v58 = vcvt.s32.f32 %v54
    %v59 = vcvt.s32.f32 %v55
    %v60 = vcvt.s32.f32 %v56
    %v61 = vlaneseq
    %v62 = vshrl.u32 %v61, 7
    %v63 = vsub.s32 0, %v62
    %v64 = vrot.slane %v23, %v63
    %vm65 = vcmp.eq.s32.totalorder %v25, %v64
    %v66 = vsel %vm65, 1, 0
    %v67 = vcvt.s32.f32 %v66
    %v68 = vld [vmem:[%s3] sm:$0xff]
    %v69 = vld [vmem:[%s3 + $0x8] sm:$0xff]
    %v70 = vld [vmem:[%s3 + $0x10] sm:$0xff]
    %v71 = vld [vmem:[%s3 + $0x18] sm:$0xff]
    %v72 = vld [vmem:[%s4] sm:$0xff]
    %v73 = vld [vmem:[%s4 + $0x8] sm:$0xff]
    %v74 = vld [vmem:[%s4 + $0x10] sm:$0xff]
    %v75 = vld [vmem:[%s4 + $0x18] sm:$0xff]
    %vm76 = vcmask 261120
    %v78 = vsel %vm76, %v68, 0
    %v81 = vsel %vm76, %v69, 0
    %v84 = vsel %vm76, %v70, 0
    %v87 = vsel %vm76, %v71, 0
    %89 = vmatprep.subr.mxu0 0.0
    %90 = vmatpush1.msra.mxu0 0.0
    %91 = vmatprep.subr.mxu0 0.0
    %92 = vmatpush1.msra.mxu0 0.0
    %93 = vmatprep.subr.mxu0 0.0
    %94 = vmatpush1.msra.mxu0 0.0
    %95 = vmatprep.subr.mxu0 0.0
    %96 = vmatpush1.msra.mxu0 0.0
    %97 = vmatprep.subr.mxu0 0.0
    %98 = vmatpush1.msra.mxu0 0.0
    %99 = vmatprep.subr.mxu0 0.0
    %100 = vmatpush1.msra.mxu0 0.0
    %101 = vmatprep.subr.mxu0 0.0
    %102 = vmatpush1.msra.mxu0 0.0
    %103 = vmatprep.subr.mxu0 0.0
    %104 = vmatpush1.msra.mxu0 0.0
    %105 = vmatprep.subr.mxu0 0.0
    %106 = vmatpush1.msra.mxu0 0.0
    %107 = vmatprep.subr.mxu0 0.0
    %108 = vmatpush1.msra.mxu0 0.0
    %109 = vmatprep.subr.mxu0 0.0
    %110 = vmatpush1.msra.mxu0 0.0
    %111 = vmatprep.subr.mxu0 0.0
    %112 = vmatpush1.msra.mxu0 0.0
    %113 = vmatprep.subr.mxu0 0.0
    %114 = vmatpush1.msra.mxu0 %v44
    %115 = vmatprep.subr.mxu0 0.0
    %116 = vmatpush1.msra.mxu0 %v43
    %117 = vmatprep.subr.mxu0 0.0
    %118 = vmatpush1.msra.mxu0 %v42
    %119 = vmatprep.subr.mxu0 0.0
    %120 = vmatpush1.msra.mxu0 %v41
    %121 = vmatprep.subr.mxu0 0.0
    %122 = vmatpush2.msra.mxu0 0.0
    %123 = vmatprep.subr.mxu0 0.0
    %124 = vmatpush2.msra.mxu0 0.0
    %125 = vmatprep.subr.mxu0 0.0
    %126 = vmatpush2.msra.mxu0 0.0
    %127 = vmatprep.subr.mxu0 0.0
    %128 = vmatpush2.msra.mxu0 0.0
    %129 = vmatprep.subr.mxu0 0.0
    %130 = vmatpush2.msra.mxu0 0.0
    %131 = vmatprep.subr.mxu0 0.0
    %132 = vmatpush2.msra.mxu0 0.0
    %133 = vmatprep.subr.mxu0 0.0
    %134 = vmatpush2.msra.mxu0 0.0
    %135 = vmatprep.subr.mxu0 0.0
    %136 = vmatpush2.msra.mxu0 0.0
    %137 = vmatprep.subr.mxu0 0.0
    %138 = vmatpush2.msra.mxu0 0.0
    %139 = vmatprep.subr.mxu0 0.0
    %140 = vmatpush2.msra.mxu0 0.0
    %141 = vmatprep.subr.mxu0 0.0
    %142 = vmatpush2.msra.mxu0 0.0
    %143 = vmatprep.subr.mxu0 0.0
    %144 = vmatpush2.msra.mxu0 0.0
    %145 = vmatprep.subr.mxu0 0.0
    %146 = vmatpush2.msra.mxu0 0.0
    %147 = vmatprep.subr.mxu0 0.0
    %148 = vmatpush2.msra.mxu0 0.0
    %149 = vmatprep.subr.mxu0 0.0
    %150 = vmatpush2.msra.mxu0 0.0
    %151 = vmatprep.subr.mxu0 0.0
    %152 = vmatpush2.msra.mxu0 0.0
    %153 = vmatprep.mubr.f32.mxu0 0.0
    %154 = vmatmul.mubr.f32.gmra.mxu0 %v78
    %v155 = vpop.f32.mrf.mxu0
    %v156 = vadd.f32 0.0, %v155
    %v157 = vpop.f32.mrf.mxu0
    %158 = vmatprep.mubr.f32.mxu0 0.0
    %159 = vmatmul.mubr.f32.gmra.mxu0 %v81
    %v160 = vpop.f32.mrf.mxu0
    %v161 = vadd.f32 0.0, %v160
    %v162 = vpop.f32.mrf.mxu0
    %163 = vmatprep.mubr.f32.mxu0 0.0
    %164 = vmatmul.mubr.f32.gmra.mxu0 %v84
    %v165 = vpop.f32.mrf.mxu0
    %v166 = vadd.f32 0.0, %v165
    %v167 = vpop.f32.mrf.mxu0
    %168 = vmatprep.mubr.f32.mxu0 0.0
    %169 = vmatmul.mubr.f32.gmra.mxu0 %v87
    %v170 = vpop.f32.mrf.mxu0
    %v171 = vadd.f32 0.0, %v170
    %v172 = vpop.f32.mrf.mxu0
    %173 = vdwg.mxu0
    %174 = vmatprep.subr.mxu0 0.0
    %175 = vmatpush1.msra.mxu0 0.0
    %176 = vmatprep.subr.mxu0 0.0
    %177 = vmatpush1.msra.mxu0 0.0
    %178 = vmatprep.subr.mxu0 0.0
    %179 = vmatpush1.msra.mxu0 0.0
    %180 = vmatprep.subr.mxu0 0.0
    %181 = vmatpush1.msra.mxu0 0.0
    %182 = vmatprep.subr.mxu0 0.0
    %183 = vmatpush1.msra.mxu0 0.0
    %184 = vmatprep.subr.mxu0 0.0
    %185 = vmatpush1.msra.mxu0 0.0
    %186 = vmatprep.subr.mxu0 0.0
    %187 = vmatpush1.msra.mxu0 0.0
    %188 = vmatprep.subr.mxu0 0.0
    %189 = vmatpush1.msra.mxu0 0.0
    %190 = vmatprep.subr.mxu0 0.0
    %191 = vmatpush1.msra.mxu0 0.0
    %192 = vmatprep.subr.mxu0 0.0
    %193 = vmatpush1.msra.mxu0 0.0
    %194 = vmatprep.subr.mxu0 0.0
    %195 = vmatpush1.msra.mxu0 0.0
    %196 = vmatprep.subr.mxu0 0.0
    %197 = vmatpush1.msra.mxu0 0.0
    %198 = vmatprep.subr.mxu0 0.0
    %199 = vmatpush1.msra.mxu0 %v60
    %200 = vmatprep.subr.mxu0 0.0
    %201 = vmatpush1.msra.mxu0 %v59
    %202 = vmatprep.subr.mxu0 0.0
    %203 = vmatpush1.msra.mxu0 %v58
    %204 = vmatprep.subr.mxu0 0.0
    %205 = vmatpush1.msra.mxu0 %v57
    %206 = vmatprep.subr.mxu0 0.0
    %207 = vmatpush2.msra.mxu0 0.0
    %208 = vmatprep.subr.mxu0 0.0
    %209 = vmatpush2.msra.mxu0 0.0
    %210 = vmatprep.subr.mxu0 0.0
    %211 = vmatpush2.msra.mxu0 0.0
    %212 = vmatprep.subr.mxu0 0.0
    %213 = vmatpush2.msra.mxu0 0.0
    %214 = vmatprep.subr.mxu0 0.0
    %215 = vmatpush2.msra.mxu0 0.0
    %216 = vmatprep.subr.mxu0 0.0
    %217 = vmatpush2.msra.mxu0 0.0
    %218 = vmatprep.subr.mxu0 0.0
    %219 = vmatpush2.msra.mxu0 0.0
    %220 = vmatprep.subr.mxu0 0.0
    %221 = vmatpush2.msra.mxu0 0.0
    %222 = vmatprep.subr.mxu0 0.0
    %223 = vmatpush2.msra.mxu0 0.0
    %224 = vmatprep.subr.mxu0 0.0
    %225 = vmatpush2.msra.mxu0 0.0
    %226 = vmatprep.subr.mxu0 0.0
    %227 = vmatpush2.msra.mxu0 0.0
    %228 = vmatprep.subr.mxu0 0.0
    %229 = vmatpush2.msra.mxu0 0.0
    %230 = vmatprep.subr.mxu0 0.0
    %231 = vmatpush2.msra.mxu0 0.0
    %232 = vmatprep.subr.mxu0 0.0
    %233 = vmatpush2.msra.mxu0 0.0
    %234 = vmatprep.subr.mxu0 0.0
    %235 = vmatpush2.msra.mxu0 0.0
    %236 = vmatprep.subr.mxu0 0.0
    %237 = vmatpush2.msra.mxu0 0.0
    %238 = vmatprep.mubr.f32.mxu0 0.0
    %239 = vmatmul.mubr.f32.gmra.mxu0 %v78
    %v240 = vpop.f32.mrf.mxu0
    %v241 = vadd.f32 0.0, %v240
    %v242 = vpop.f32.mrf.mxu0
    %243 = vmatprep.mubr.f32.mxu0 0.0
    %244 = vmatmul.mubr.f32.gmra.mxu0 %v81
    %v245 = vpop.f32.mrf.mxu0
    %v246 = vadd.f32 0.0, %v245
    %v247 = vpop.f32.mrf.mxu0
    %248 = vmatprep.mubr.f32.mxu0 0.0
    %249 = vmatmul.mubr.f32.gmra.mxu0 %v84
    %v250 = vpop.f32.mrf.mxu0
    %v251 = vadd.f32 0.0, %v250
    %v252 = vpop.f32.mrf.mxu0
    %253 = vmatprep.mubr.f32.mxu0 0.0
    %254 = vmatmul.mubr.f32.gmra.mxu0 %v87
    %v255 = vpop.f32.mrf.mxu0
    %v256 = vadd.f32 0.0, %v255
    %v257 = vpop.f32.mrf.mxu0
    %258 = vdwg.mxu0
    %vm259 = vcmask 31744
    %v261 = vsel %vm259, %v72, 0
    %v264 = vsel %vm259, %v73, 0
    %v267 = vsel %vm259, %v74, 0
    %v270 = vsel %vm259, %v75, 0
    %vm272 = vcmask 1043456
    %v274 = vsel %vm272, %v67, 0
    %276 = vmatprep.subr.mxu0 0.0
    %277 = vmatpush1.msra.mxu0 0.0
    %278 = vmatprep.subr.mxu0 0.0
    %279 = vmatpush1.msra.mxu0 0.0
    %280 = vmatprep.subr.mxu0 0.0
    %281 = vmatpush1.msra.mxu0 0.0
    %282 = vmatprep.subr.mxu0 0.0
    %283 = vmatpush1.msra.mxu0 0.0
    %284 = vmatprep.subr.mxu0 0.0
    %285 = vmatpush1.msra.mxu0 0.0
    %286 = vmatprep.subr.mxu0 0.0
    %287 = vmatpush1.msra.mxu0 0.0
    %288 = vmatprep.subr.mxu0 0.0
    %289 = vmatpush1.msra.mxu0 0.0
    %290 = vmatprep.subr.mxu0 0.0
    %291 = vmatpush1.msra.mxu0 0.0
    %292 = vmatprep.subr.mxu0 0.0
    %293 = vmatpush1.msra.mxu0 0.0
    %294 = vmatprep.subr.mxu0 0.0
    %295 = vmatpush1.msra.mxu0 0.0
    %296 = vmatprep.subr.mxu0 0.0
    %297 = vmatpush1.msra.mxu0 0.0
    %298 = vmatprep.subr.mxu0 0.0
    %299 = vmatpush1.msra.mxu0 0.0
    %300 = vmatprep.subr.mxu0 0.0
    %301 = vmatpush1.msra.mxu0 0.0
    %302 = vmatprep.subr.mxu0 0.0
    %303 = vmatpush1.msra.mxu0 0.0
    %304 = vmatprep.subr.mxu0 0.0
    %305 = vmatpush1.msra.mxu0 0.0
    %306 = vmatprep.subr.mxu0 0.0
    %307 = vmatpush1.msra.mxu0 %v274
    %308 = vmatprep.subr.mxu0 0.0
    %309 = vmatpush2.msra.mxu0 0.0
    %310 = vmatprep.subr.mxu0 0.0
    %311 = vmatpush2.msra.mxu0 0.0
    %312 = vmatprep.subr.mxu0 0.0
    %313 = vmatpush2.msra.mxu0 0.0
    %314 = vmatprep.subr.mxu0 0.0
    %315 = vmatpush2.msra.mxu0 0.0
    %316 = vmatprep.subr.mxu0 0.0
    %317 = vmatpush2.msra.mxu0 0.0
    %318 = vmatprep.subr.mxu0 0.0
    %319 = vmatpush2.msra.mxu0 0.0
    %320 = vmatprep.subr.mxu0 0.0
    %321 = vmatpush2.msra.mxu0 0.0
    %322 = vmatprep.subr.mxu0 0.0
    %323 = vmatpush2.msra.mxu0 0.0
    %324 = vmatprep.subr.mxu0 0.0
    %325 = vmatpush2.msra.mxu0 0.0
    %326 = vmatprep.subr.mxu0 0.0
    %327 = vmatpush2.msra.mxu0 0.0
    %328 = vmatprep.subr.mxu0 0.0
    %329 = vmatpush2.msra.mxu0 0.0
    %330 = vmatprep.subr.mxu0 0.0
    %331 = vmatpush2.msra.mxu0 0.0
    %332 = vmatprep.subr.mxu0 0.0
    %333 = vmatpush2.msra.mxu0 0.0
    %334 = vmatprep.subr.mxu0 0.0
    %335 = vmatpush2.msra.mxu0 0.0
    %336 = vmatprep.subr.mxu0 0.0
    %337 = vmatpush2.msra.mxu0 0.0
    %338 = vmatprep.subr.mxu0 0.0
    %339 = vmatpush2.msra.mxu0 0.0
    %340 = vmatprep.mubr.f32.mxu0 0.0
    %341 = vmatmul.mubr.f32.gmra.mxu0 %v261
    %v342 = vpop.f32.mrf.mxu0
    %v343 = vadd.f32 0.0, %v342
    %v344 = vpop.f32.mrf.mxu0
    %345 = vmatprep.mubr.f32.mxu0 0.0
    %346 = vmatmul.mubr.f32.gmra.mxu0 %v264
    %v347 = vpop.f32.mrf.mxu0
    %v348 = vadd.f32 0.0, %v347
    %v349 = vpop.f32.mrf.mxu0
    %350 = vmatprep.mubr.f32.mxu0 0.0
    %351 = vmatmul.mubr.f32.gmra.mxu0 %v267
    %v352 = vpop.f32.mrf.mxu0
    %v353 = vadd.f32 0.0, %v352
    %v354 = vpop.f32.mrf.mxu0
    %355 = vmatprep.mubr.f32.mxu0 0.0
    %356 = vmatmul.mubr.f32.gmra.mxu0 %v270
    %v357 = vpop.f32.mrf.mxu0
    %v358 = vadd.f32 0.0, %v357
    %v359 = vpop.f32.mrf.mxu0
    %360 = vdwg.mxu0
    %v361 = vmul.f32 %v156, %v241
    %v362 = vmul.f32 %v161, %v246
    %v363 = vmul.f32 %v166, %v251
    %v364 = vmul.f32 %v171, %v256
    %v365 = vmul.f32 %v361, %v343
    %v366 = vmul.f32 %v362, %v348
    %v367 = vmul.f32 %v363, %v353
    %v368 = vmul.f32 %v364, %v358
    %v369 = vadd.f32 %v365, %v366
    %v370 = vadd.f32 %v369, %v367
    %v371 = vadd.f32 %v370, %v368
    %v372 = vrot.slane %v371, 4
    %v373 = vadd.f32 %v371, %v372
    %v374 = vrot.slane %v373, 2
    %v375 = vadd.f32 %v373, %v374
    %v376 = vrot.slane %v375, 1
    %v377 = vadd.f32 %v375, %v376
    %v378 = vxor.u32 %v377, 2147483648
    %v379 = vmul.f32 %v378, 1.442695
    %v380 = vpow.pop %v379
    %v381 = vadd.f32 %v380, 1.0
    %v382 = vrcp.pop %v381
    %v383 = vmul.f32 1.0, %v382
    %384 = vst [vmem:[#allocation2] sm:$0x1] %v383
    // Predicated region
    $region22: #{tpu_custom_call.1} parent=1 // pred_check
      _
    $region23: #{tpu_custom_call.1} parent=1 // pred_check_branch
      %386 = sbr.rel (0) target = $region25
    $region24: #{tpu_custom_call.1} parent=1 // pred_region
      %s388 = ssub.s32 16, 16
      %389 = vsyncadd [#allocation3], %s388
      %s391 = sshll.u32 [#allocation2], 4
      %s392 = int_to_ptr.vmem [resolvable:$true] %s391
      %394 = dma.vmem_to_hbm [thread:$0]  %s392, 16, %s5, [#allocation3]
    $region25: #{tpu_custom_call.1} parent=1 // pred_fallthru
      _
    // Predicated region
    $region26: #{tpu_custom_call.1} parent=1 // pred_check
      _
    $region27: #{tpu_custom_call.1} parent=1 // pred_check_branch
      %396 = sbr.rel (0) target = $region29
    $region28: #{tpu_custom_call.1} parent=1 // pred_region
      %397 = dma.done [#allocation3], 16
    $region29: #{tpu_custom_call.1} parent=1 // pred_fallthru
      _
    %398 = vsyncpa [#allocation3], 1

</llo_original>
